<compile_context>
chip_gen: v5e
topology: v5e:2x2
jax: 0.10.0
libtpu: 0.0.40
codegen_flags: <defaults>
</compile_context>

<pallas_src>
import functools

import jax
import jax.numpy as jnp
from jax.experimental import pallas as pl
from jax.experimental.pallas import tpu as pltpu


def _attn_kernel(hidp_ref, enc_ref, w2t_ref, v_ref, out_ref, *, TB, S, S_pad, H):
    # hidp_ref: (TB, H)        f32   hid @ W1^T + bias for this batch block
    # enc_ref:  (TB*S_pad, H)        encoder rows (native dtype, flattened row-major)
    # w2t_ref:  (H, H)               W[:, H:]^T, same dtype as the encoder feed
    # v_ref:    (1, H)         f32
    # out_ref:  (TB, S_pad)    f32   softmax over the sequence axis
    # Single MXU contraction over H for the whole (TB*S_pad)-row block, f32 accumulate.
    pre = jnp.dot(enc_ref[...], w2t_ref[...], preferred_element_type=jnp.float32)
    # Regroup rows per batch element (free: S_pad % 8 == 0) and add the hoisted hidden
    # projection (Linear bias already folded in).
    pre = pre.reshape(TB, S_pad, H) + hidp_ref[...][:, None, :]      # (TB, S_pad, H) f32
    t = jnp.tanh(pre)

    # e[b, s] = sum_h v_h * tanh(...)[b, s, h]   (lane reduce; scores stay lane-dense)
    scores = jnp.sum(t * v_ref[...], axis=-1)                        # (TB, S_pad) f32
    if S_pad != S:
        lane = jax.lax.broadcasted_iota(jnp.int32, (TB, S_pad), 1)
        scores = jnp.where(lane < S, scores, -1e30)                  # mask padded positions

    # Softmax along the sequence (lane) axis, all in f32.
    m = jnp.max(scores, axis=-1, keepdims=True)                      # (TB, 1)
    e = jnp.exp(scores - m)
    denom = jnp.sum(e, axis=-1, keepdims=True)
    inv = pl.reciprocal(denom, approx=True)                          # EUP slot
    inv = inv * (2.0 - denom * inv)                                  # one Newton step -> ~f32 exact
    out_ref[...] = (e * inv).astype(out_ref.dtype)


def _choose_tb(B, per_row_bytes, budget_bytes):
    """Batch rows per grid step: VMEM-budgeted, >=2 grid steps when possible, no batch pad."""
    tb_budget = max(1, budget_bytes // per_row_bytes)
    tb_cap = max(1, min(tb_budget, B // 2 if B >= 2 else 1))
    # Prefer a multiple of 8 (keeps every (sublane, lane) BlockSpec tile-aligned) that divides
    # B exactly -> no batch padding and no partial blocks.
    for cand in range((min(tb_cap, B) // 8) * 8, 0, -8):
        if B % cand == 0:
            return cand
    # Small / awkward batches: take the whole batch in a single grid step if it fits.
    if B <= max(tb_budget, 8):
        return B
    # Rare fallback (large batch with no suitable divisor): accept a small batch pad.
    return max(8, (tb_budget // 8) * 8)


def attn_forward(hidden, encoder_outputs, W, b, v):
    """hidden: (1, B, H); encoder_outputs: (B, S, H); W: (H, 2H); b, v: (H,)."""
    B = hidden.shape[1]
    H = hidden.shape[2]
    S = encoder_outputs.shape[1]
    enc_dtype = encoder_outputs.dtype

    # Split Linear(2H -> H): first H columns hit the repeated hidden state, last H columns hit
    # encoder_outputs (matches torch.cat((hidden, enc), dim=2)).  The tiny hidden projection is
    # hoisted out of the kernel; W2 is pre-transposed and kept in the encoder's dtype so the
    # MXU sees matching (bf16 or f32) operands.
    hid = jnp.transpose(hidden, (1, 0, 2)).reshape(B, -1).astype(jnp.float32)
    W1 = W[:, :H].astype(jnp.float32)
    hid_proj = hid @ W1.T + b.astype(jnp.float32)                    # (B, H) f32, hoisted
    W2t = jnp.transpose(W[:, H:]).astype(enc_dtype)                  # (H, H), pre-transposed
    v2 = v.reshape(1, H).astype(jnp.float32)

    # Encoder feed: native dtype, no copy.  Pad S only if it is not sublane-aligned.
    S_pad = ((S + 7) // 8) * 8
    enc = encoder_outputs
    if S_pad != S:
        enc = jnp.pad(enc, ((0, 0), (0, S_pad - S), (0, 0)))         # copy only when S % 8 != 0

    # TB from a VMEM byte budget (dominant live data: double-buffered enc block in native dtype
    # plus the f32 pre-activation / tanh temporaries; H lane-padded to 128), capped at B//2 so
    # the "parallel" batch axis can split across v7x's two TensorCores.
    elt = jnp.dtype(enc_dtype).itemsize
    H_lanes = ((H + 127) // 128) * 128
    S_lanes = ((S_pad + 127) // 128) * 128
    per_row = (S_pad * H_lanes * (2 * elt + 2 * 4)                   # enc (x2 bufs) + pre/tanh f32
               + 2 * 4 * H_lanes + 2 * 4 * S_lanes)                  # hid_proj + out blocks
    TB = _choose_tb(B, per_row, budget_bytes=8 * 1024 * 1024)

    B_pad = ((B + TB - 1) // TB) * TB
    if B_pad != B:                                                   # rare fallback path only
        enc = jnp.pad(enc, ((0, B_pad - B), (0, 0), (0, 0)))
        hid_proj = jnp.pad(hid_proj, ((0, B_pad - B), (0, 0)))
    enc2d = enc.reshape(B_pad * S_pad, H)                            # free row-major view

    kernel = functools.partial(_attn_kernel, TB=TB, S=S, S_pad=S_pad, H=H)
    probs = pl.pallas_call(
        kernel,
        out_shape=jax.ShapeDtypeStruct((B_pad, S_pad), jnp.float32),
        grid_spec=pltpu.PrefetchScalarGridSpec(
            num_scalar_prefetch=0,
            grid=(B_pad // TB,),
            in_specs=[
                pl.BlockSpec((TB, H), lambda i: (i, 0)),             # hid_proj block
                pl.BlockSpec((TB * S_pad, H), lambda i: (i, 0)),     # encoder rows block
                pl.BlockSpec((H, H), lambda i: (0, 0)),              # W2^T (shared)
                pl.BlockSpec((1, H), lambda i: (0, 0)),              # v (shared)
            ],
            out_specs=pl.BlockSpec((TB, S_pad), lambda i: (i, 0)),
        ),
        compiler_params=pltpu.CompilerParams(
            dimension_semantics=("parallel",),
        ),
    )(hid_proj, enc2d, W2t, v2)

    out = probs if (B_pad == B and S_pad == S) else probs[:B, :S]
    return out.reshape(B, 1, S).astype(enc_dtype)                    # layout plumbing only


def attn_reference(hidden, encoder_outputs, W, b, v):
    B = hidden.shape[1]
    S = encoder_outputs.shape[1]
    hid = jnp.transpose(hidden, (1, 0, 2)).reshape(B, -1)            # (B, H)
    hid_rep = jnp.broadcast_to(hid[:, None, :], (B, S, hid.shape[-1]))
    cat = jnp.concatenate([hid_rep, encoder_outputs], axis=2)        # (B, S, 2H)
    energies = jnp.sum(v * jnp.tanh(cat @ W.T + b), axis=2)          # (B, S)
    return jax.nn.softmax(energies, axis=1)[:, None, :]              # (B, 1, S)


if __name__ == "__main__":
    B, S, H = 2, 8, 32
    key = jax.random.PRNGKey(0)
    k_h, k_e, k_w, k_b, k_v = jax.random.split(key, 5)

    hidden = jax.random.normal(k_h, (1, B, H), dtype=jnp.float32)
    encoder_outputs = jax.random.normal(k_e, (B, S, H), dtype=jnp.float32)

    # Deterministic parameter init mimicking nn.Linear defaults and torch.rand(v).
    bound = 1.0 / jnp.sqrt(2.0 * H)
    W = jax.random.uniform(k_w, (H, 2 * H), jnp.float32, -bound, bound)
    b = jax.random.uniform(k_b, (H,), jnp.float32, -bound, bound)
    v = jax.random.uniform(k_v, (H,), jnp.float32, 0.0, 1.0)

    out = attn_forward(hidden, encoder_outputs, W, b, v)
    out = jax.block_until_ready(out)

    ref = attn_reference(hidden, encoder_outputs, W, b, v)
    assert out.shape == (B, 1, S)
    assert jnp.allclose(out, ref, atol=1e-4, rtol=1e-4), float(jnp.max(jnp.abs(out - ref)))

    print("KERNEL_OK")
</pallas_src>

<mosaic_0001>
module attributes {stable_mosaic.version = 11 : i64} {
  func.func @_attn_kernel(%arg0: i32, %arg1: memref<2x32xf32, #tpu.memory_space<vmem>>, %arg2: memref<16x32xf32, #tpu.memory_space<vmem>>, %arg3: memref<32x32xf32, #tpu.memory_space<vmem>>, %arg4: memref<1x32xf32, #tpu.memory_space<vmem>>, %arg5: memref<2x8xf32, #tpu.memory_space<vmem>>) attributes {dimension_semantics = [#tpu.dimension_semantics<parallel>], iteration_bounds = array<i64: 1>, scalar_prefetch = 0 : i64, scratch_operands = 0 : i64, tpu.core_type = #tpu.core_type<tc>, window_params = [{transform_indices = @transform_0, window_bounds = array<i64: 2, 32>}, {transform_indices = @transform_1, window_bounds = array<i64: 16, 32>}, {pipeline_mode = #tpu.pipeline_mode<synchronous>, transform_indices = @transform_2, window_bounds = array<i64: 32, 32>}, {pipeline_mode = #tpu.pipeline_mode<synchronous>, transform_indices = @transform_3, window_bounds = array<i64: 1, 32>}, {transform_indices = @transform_4, window_bounds = array<i64: 2, 8>}]} {
    %c0 = arith.constant 0 : index
    %c0_0 = arith.constant 0 : index
    %0 = vector.load %arg2[%c0, %c0_0] : memref<16x32xf32, #tpu.memory_space<vmem>>, vector<16x32xf32>
    %c0_1 = arith.constant 0 : index
    %c0_2 = arith.constant 0 : index
    %1 = vector.load %arg3[%c0_1, %c0_2] : memref<32x32xf32, #tpu.memory_space<vmem>>, vector<32x32xf32>
    %cst = arith.constant dense<0.000000e+00> : vector<16x32xf32>
    %2 = tpu.matmul %0, %1, %cst {dimension_numbers = #tpu.dot_dimension_numbers<[1], [0], [0], [1], [0, 0, 1, 1], [], []>} : vector<16x32xf32>, vector<32x32xf32>, vector<16x32xf32> -> vector<16x32xf32>
    %3 = vector.shape_cast %2 : vector<16x32xf32> to vector<2x8x32xf32>
    %c0_3 = arith.constant 0 : index
    %c0_4 = arith.constant 0 : index
    %4 = vector.load %arg1[%c0_3, %c0_4] : memref<2x32xf32, #tpu.memory_space<vmem>>, vector<2x32xf32>
    %5 = vector.shape_cast %4 : vector<2x32xf32> to vector<2x1x32xf32>
    %6 = vector.broadcast %5 : vector<2x1x32xf32> to vector<2x8x32xf32>
    %7 = arith.addf %3, %6 : vector<2x8x32xf32>
    %8 = math.tanh %7 : vector<2x8x32xf32>
    %c0_5 = arith.constant 0 : index
    %c0_6 = arith.constant 0 : index
    %9 = vector.load %arg4[%c0_5, %c0_6] : memref<1x32xf32, #tpu.memory_space<vmem>>, vector<1x32xf32>
    %10 = vector.shape_cast %9 : vector<1x32xf32> to vector<1x1x32xf32>
    %11 = vector.broadcast %10 : vector<1x1x32xf32> to vector<2x8x32xf32>
    %12 = arith.mulf %8, %11 : vector<2x8x32xf32>
    %cst_7 = arith.constant dense<0.000000e+00> : vector<2x8xf32>
    %13 = vector.multi_reduction <add>, %12, %cst_7 [2] : vector<2x8x32xf32> to vector<2x8xf32>
    %cst_8 = arith.constant dense<0xFF800000> : vector<2xf32>
    %14 = vector.multi_reduction <maximumf>, %13, %cst_8 [1] : vector<2x8xf32> to vector<2xf32>
    %15 = vector.shape_cast %14 : vector<2xf32> to vector<2x1xf32>
    %16 = vector.broadcast %15 : vector<2x1xf32> to vector<2x8xf32>
    %17 = arith.subf %13, %16 : vector<2x8xf32>
    %18 = math.exp %17 : vector<2x8xf32>
    %cst_9 = arith.constant dense<0.000000e+00> : vector<2xf32>
    %19 = vector.multi_reduction <add>, %18, %cst_9 [1] : vector<2x8xf32> to vector<2xf32>
    %20 = vector.shape_cast %19 : vector<2xf32> to vector<2x1xf32>
    %21 = tpu.reciprocal %20 {approx = true} : vector<2x1xf32> -> vector<2x1xf32>
    %22 = arith.mulf %20, %21 : vector<2x1xf32>
    %cst_10 = arith.constant 2.000000e+00 : f32
    %23 = vector.broadcast %cst_10 : f32 to vector<2x1xf32>
    %24 = arith.subf %23, %22 : vector<2x1xf32>
    %25 = arith.mulf %21, %24 : vector<2x1xf32>
    %26 = vector.broadcast %25 : vector<2x1xf32> to vector<2x8xf32>
    %27 = arith.mulf %18, %26 : vector<2x8xf32>
    %c0_11 = arith.constant 0 : index
    %c0_12 = arith.constant 0 : index
    %28 = vector.load %arg5[%c0_11, %c0_12] : memref<2x8xf32, #tpu.memory_space<vmem>>, vector<2x8xf32>
    tpu.vector_store %arg5[%c0_11, %c0_12], %27 {strides = array<i32>} : memref<2x8xf32, #tpu.memory_space<vmem>>, vector<2x8xf32>,
    return
  }
  func.func @transform_0(%arg0: i32) -> (i32, i32) {
    %c0_i32 = arith.constant 0 : i32
    %c0_i32_0 = arith.constant 0 : i32
    return %arg0, %c0_i32 : i32, i32
  }
  func.func @transform_1(%arg0: i32) -> (i32, i32) {
    %c0_i32 = arith.constant 0 : i32
    %c0_i32_0 = arith.constant 0 : i32
    return %arg0, %c0_i32 : i32, i32
  }
  func.func @transform_2(%arg0: i32) -> (i32, i32) {
    %c0_i32 = arith.constant 0 : i32
    %c0_i32_0 = arith.constant 0 : i32
    %c0_i32_1 = arith.constant 0 : i32
    return %c0_i32, %c0_i32_0 : i32, i32
  }
  func.func @transform_3(%arg0: i32) -> (i32, i32) {
    %c0_i32 = arith.constant 0 : i32
    %c0_i32_0 = arith.constant 0 : i32
    %c0_i32_1 = arith.constant 0 : i32
    return %c0_i32, %c0_i32_0 : i32, i32
  }
  func.func @transform_4(%arg0: i32) -> (i32, i32) {
    %c0_i32 = arith.constant 0 : i32
    %c0_i32_0 = arith.constant 0 : i32
    return %arg0, %c0_i32 : i32, i32
  }
}

</mosaic_0001>

<llo_original>
// kernel: tpu_custom_call.1
$region0: #{tpu_custom_call.1}
  #allocation0 [shape = 'u32[]', space=smem, size = 0x4, offset = 0x4, fixed_abs, tag = 'smem constant byte address 0x4 - core index']
  #allocation1 [shape = 'u32[72,128]{1,0:T(1,128)}', space=vmem, size = 0x9000, scoped, tag = 'internal scratch']
  %s0 = inlined_call_operand.hbm [shape: f32[2,32], index: 0, kind: input, shape index: {}]
  %s1 = inlined_call_operand.hbm [shape: f32[16,32], index: 1, kind: input, shape index: {}]
  %s2 = inlined_call_operand.hbm [shape: f32[32,32], index: 2, kind: input, shape index: {}]
  %s3 = inlined_call_operand.vmem [shape: f32[1,32], index: 3, kind: input, shape index: {}]
  %s4 = inlined_call_operand.hbm [shape: f32[2,8], index: 4, kind: output, shape index: {}]
  %s5 = sld [smem:[#allocation0]]
  $region38: #{tpu_custom_call.1} parent=0
    _
  %s7 = ssub.s32 1, %s5
  %s8 = scalar_select 0, %s7, %s5
  $region1: #{tpu_custom_call.1} parent=0
    #allocation2 [shape = 'u8[1024]{0}', space=vmem, size = 0x400, scoped, tag = 'input window, operand 0, single buffered']
    #allocation3 [shape = 's32[1]{0}', space=sflag, size = 0x4, scoped, tag = 'scoped memory for tpu_custom_call.1']
    #allocation4 [shape = 's32[1]{0}', space=sflag, size = 0x4, scoped, tag = 'scoped memory for tpu_custom_call.1']
    #allocation5 [shape = 'u8[8192]{0}', space=vmem, size = 0x2000, scoped, tag = 'input window, operand 1, single buffered']
    #allocation6 [shape = 's32[1]{0}', space=sflag, size = 0x4, scoped, tag = 'scoped memory for tpu_custom_call.1']
    #allocation7 [shape = 'u8[16384]{0}', space=vmem, size = 0x4000, scoped, tag = 'input window, operand 2, single buffered']
    #allocation8 [shape = 'u8[1024]{0}', space=vmem, size = 0x400, scoped, tag = 'output window, operand 0, single buffered']
    %9 = vsyncpa [#allocation3], 0
    %10 = vsyncpa [#allocation6], 0
    %11 = vsyncpa [#allocation4], 0
    // Predicated region
    $region2: #{tpu_custom_call.1} parent=1 // pred_check
      _
    $region3: #{tpu_custom_call.1} parent=1 // pred_check_branch
      %13 = sbr.rel (0) target = $region5
    $region4: #{tpu_custom_call.1} parent=1 // pred_region
      %15 = vsyncadd [#allocation3], 0
      %s17 = sshll.u32 %s0, 4
      %s18 = int_to_ptr.hbm [resolvable:$true] %s17
      %s19 = sshll.u32 [#allocation2], 4
      %s20 = int_to_ptr.vmem [resolvable:$true] %s19
      %22 = dma.hbm_to_vmem [thread:$0]  %s18, 32, %s20, [#allocation3]
    $region5: #{tpu_custom_call.1} parent=1 // pred_fallthru
      _
    // Predicated region
    $region6: #{tpu_custom_call.1} parent=1 // pred_check
      _
    $region7: #{tpu_custom_call.1} parent=1 // pred_check_branch
      %24 = sbr.rel (0) target = $region9
    $region8: #{tpu_custom_call.1} parent=1 // pred_region
      %26 = vsyncadd [#allocation6], 0
      %s27 = sshll.u32 %s1, 4
      %s28 = int_to_ptr.hbm [resolvable:$true] %s27
      %s29 = sshll.u32 [#allocation5], 4
      %s30 = int_to_ptr.vmem [resolvable:$true] %s29
      %35 = dma.hbm_to_vmem [thread:$0]  %s28, 256, %s30, [#allocation6], 128, 128, 8
    $region9: #{tpu_custom_call.1} parent=1 // pred_fallthru
      _
    // Predicated region
    $region10: #{tpu_custom_call.1} parent=1 // pred_check
      _
    $region11: #{tpu_custom_call.1} parent=1 // pred_check_branch
      %37 = sbr.rel (0) target = $region13
    $region12: #{tpu_custom_call.1} parent=1 // pred_region
      %39 = vsyncadd [#allocation6], 0
      %s40 = sshll.u32 %s2, 4
      %s41 = int_to_ptr.hbm [resolvable:$true] %s40
      %s42 = sshll.u32 [#allocation7], 4
      %s43 = int_to_ptr.vmem [resolvable:$true] %s42
      %48 = dma.hbm_to_vmem [thread:$0]  %s41, 512, %s43, [#allocation6], 128, 128, 8
    $region13: #{tpu_custom_call.1} parent=1 // pred_fallthru
      _
    // Predicated region
    $region14: #{tpu_custom_call.1} parent=1 // pred_check
      _
    $region15: #{tpu_custom_call.1} parent=1 // pred_check_branch
      %50 = sbr.rel (0) target = $region17
    $region16: #{tpu_custom_call.1} parent=1 // pred_region
      _
    $region17: #{tpu_custom_call.1} parent=1 // pred_fallthru
      _
    // Predicated region
    $region18: #{tpu_custom_call.1} parent=1 // pred_check
      _
    $region19: #{tpu_custom_call.1} parent=1 // pred_check_branch
      %52 = sbr.rel (0) target = $region21
    $region20: #{tpu_custom_call.1} parent=1 // pred_region
      %54 = dma.done [#allocation3], 32
    $region21: #{tpu_custom_call.1} parent=1 // pred_fallthru
      _
    // Predicated region
    $region22: #{tpu_custom_call.1} parent=1 // pred_check
      _
    $region23: #{tpu_custom_call.1} parent=1 // pred_check_branch
      %56 = sbr.rel (0) target = $region25
    $region24: #{tpu_custom_call.1} parent=1 // pred_region
      %58 = dma.done [#allocation6], 256
    $region25: #{tpu_custom_call.1} parent=1 // pred_fallthru
      _
    // Predicated region
    $region26: #{tpu_custom_call.1} parent=1 // pred_check
      _
    $region27: #{tpu_custom_call.1} parent=1 // pred_check_branch
      %60 = sbr.rel (0) target = $region29
    $region28: #{tpu_custom_call.1} parent=1 // pred_region
      %62 = dma.done [#allocation6], 512
    $region29: #{tpu_custom_call.1} parent=1 // pred_fallthru
      _
    %v63 = vld [vmem:[#allocation5] sm:$0xff]
    %v64 = vld [vmem:[#allocation5 + $0x8] sm:$0xff]
    %v65 = vld [vmem:[#allocation7] sm:$0xff]
    %v66 = vld [vmem:[#allocation7 + $0x8] sm:$0xff]
    %v67 = vld [vmem:[#allocation7 + $0x10] sm:$0xff]
    %v68 = vld [vmem:[#allocation7 + $0x18] sm:$0xff]
    %vm69 = vcmask 261120
    %v71 = vsel %vm69, %v63, 0
    %v74 = vsel %vm69, %v64, 0
    %76 = vmatpush.msra.mxu0 0.0
    %77 = vmatpush.msra.mxu0 0.0
    %78 = vmatpush.msra.mxu0 0.0
    %79 = vmatpush.msra.mxu0 0.0
    %80 = vmatpush.msra.mxu0 0.0
    %81 = vmatpush.msra.mxu0 0.0
    %82 = vmatpush.msra.mxu0 0.0
    %83 = vmatpush.msra.mxu0 0.0
    %84 = vmatpush.msra.mxu0 0.0
    %85 = vmatpush.msra.mxu0 0.0
    %86 = vmatpush.msra.mxu0 0.0
    %87 = vmatpush.msra.mxu0 0.0
    %88 = vmatpush.msra.mxu0 %v68
    %89 = vmatpush.msra.mxu0 %v67
    %90 = vmatpush.msra.mxu0 %v66
    %91 = vmatpush.msra.mxu0 %v65
    %92 = vmatmul.f32.gmra.mxu0 %v71
    %v93 = vpop.f32.mrf.mxu0
    %v94 = vadd.f32 0.0, %v93
    %95 = vmatmul.f32.gmra.mxu0 %v74
    %v96 = vpop.f32.mrf.mxu0
    %v97 = vadd.f32 0.0, %v96
    %98 = vdwg.mxu0
    %v99 = vld [vmem:[#allocation2] sm:$0x3]
    %v101 = vrot.slane %v99, 1
    %v102 = vperm.slane %v99, 0
    %v103 = vperm.slane %v101, 0
    %v106 = vadd.f32 %v94, %v102
    %v107 = vadd.f32 %v97, %v103
    %v108 = vtanh.pop %v106
    %v109 = vtanh.pop %v107
    %v110 = vld [vmem:[%s3] sm:$0x1]
    %v112 = vperm.slane %v110, 0
    %v114 = vmul.f32 %v108, %v112
    %v115 = vmul.f32 %v109, %v112
    %v116 = vsel %vm69, %v114, 0.0
    %117 = vadd.xlane.f32.xlu0 %v116
    %v118 = vpop.xlane.xlu0 %117
    %v119 = vsel %vm69, %v115, 0.0
    %120 = vadd.xlane.f32.xlu0 %v119
    %v121 = vpop.xlane.xlu0 %120
    %v124 = vlaneseq
    %v125 = vand.u32 %v124, 127
    %v126 = vperm.slane %v118, %v125
    %v127 = vperm.slane %v121, %v125
    %vm128 = vcmask 1041409
    %v129 = vsel %vm128, %v127, %v126
    %vm131 = vcmask 58368
    %v132 = vsel %vm131, %v129, -inf
    %133 = vmax.xlane.f32.xlu0 %v132
    %v134 = vpop.xlane.xlu0 %133
    %v136 = vperm.slane %v134, 0
    %v137 = vperm.slane %v134, 1
    %v140 = vsub.f32 %v118, %v136
    %v141 = vsub.f32 %v121, %v137
    %v142 = vmul.f32 %v140, 1.442695
    %v143 = vpow.pop %v142
    %v144 = vmul.f32 %v141, 1.442695
    %v145 = vpow.pop %v144
    %148 = vset.pattern.permute.xlu0 0
    %149 = vperm.xlu0 %148, %v143
    %v150 = vpop.permute.xlu0 %149
    %151 = vset.pattern.permute.xlu0 0
    %152 = vperm.xlu0 %151, %v145
    %v153 = vpop.permute.xlu0 %152
    %v154 = vperm.slane %v150, %v125
    %v155 = vperm.slane %v153, %v125
    %v156 = vsel %vm128, %v155, %v154
    %v158 = vsel %vm131, %v156, 0.0
    %159 = vadd.xlane.f32.xlu0 %v158
    %v160 = vpop.xlane.xlu0 %159
    %v161 = vrcp.pop %v160
    %v162 = vmul.f32 %v160, %v161
    %v163 = vsub.f32 2.0, %v162
    %v164 = vmul.f32 %v161, %v163
    %v166 = vperm.slane %v164, 0
    %v167 = vperm.slane %v164, 1
    %v170 = vmul.f32 %v143, %v166
    %v171 = vmul.f32 %v145, %v167
    %174 = vset.pattern.permute.xlu0 0
    %175 = vperm.xlu0 %174, %v170
    %v176 = vpop.permute.xlu0 %175
    %177 = vset.pattern.permute.xlu0 0
    %178 = vperm.xlu0 %177, %v171
    %v179 = vpop.permute.xlu0 %178
    %v180 = vperm.slane %v176, %v125
    %v181 = vperm.slane %v179, %v125
    %v182 = vsel %vm128, %v181, %v180
    %184 = vst.msk [vmem:[#allocation8] sm:$0x3] %vm131, %v182
    // Predicated region
    $region30: #{tpu_custom_call.1} parent=1 // pred_check
      _
    $region31: #{tpu_custom_call.1} parent=1 // pred_check_branch
      %186 = sbr.rel (0) target = $region33
    $region32: #{tpu_custom_call.1} parent=1 // pred_region
      %188 = vsyncadd [#allocation4], 0
      %s190 = sshll.u32 [#allocation8], 4
      %s191 = int_to_ptr.vmem [resolvable:$true] %s190
      %s192 = sshll.u32 %s4, 4
      %s193 = int_to_ptr.hbm [resolvable:$true] %s192
      %195 = dma.vmem_to_hbm [thread:$0]  %s191, 32, %s193, [#allocation4]
    $region33: #{tpu_custom_call.1} parent=1 // pred_fallthru
      _
    // Predicated region
    $region34: #{tpu_custom_call.1} parent=1 // pred_check
      _
    $region35: #{tpu_custom_call.1} parent=1 // pred_check_branch
      %197 = sbr.rel (0) target = $region37
    $region36: #{tpu_custom_call.1} parent=1 // pred_region
      %199 = dma.done [#allocation4], 32
    $region37: #{tpu_custom_call.1} parent=1 // pred_fallthru
      _
    %200 = vsyncpa [#allocation3], 1
    %201 = vsyncpa [#allocation6], 1
    %202 = vsyncpa [#allocation4], 1

</llo_original>
